<compile_context>
chip_gen: v7x
topology: tpu7x:2x2x1
jax: 0.10.0
libtpu: 0.0.40
codegen_flags: <defaults>
</compile_context>

<pallas_src>
import jax
import jax.numpy as jnp
from jax import lax
from jax.experimental import pallas as pl
from jax.experimental.pallas import tpu as pltpu


_CONTRACT_LAST = (((1,), (1,)), ((), ()))   # contract last axis of both operands


def _matmul_t(x_f32, w_bf16):
    """x @ w.T on the MXU without materializing a transpose (bf16 in, f32 acc)."""
    return lax.dot_general(x_f32.astype(jnp.bfloat16), w_bf16,
                           dimension_numbers=_CONTRACT_LAST,
                           preferred_element_type=jnp.float32)


# ----------------------------- kernels --------------------------------------

def _step_kernel(z_ref, w2_ref, w1_ref, a_ref, h2_ref, h1_ref, o_ref):
    z = z_ref[...]                                        # (TB, M) f32
    hid = _matmul_t(z, w2_ref[...])                       # (TB, L) f32 acc
    hid = jnp.maximum(hid + h2_ref[...], 0.0)             # f32 ReLU epilogue
    mm = _matmul_t(hid, w1_ref[...])                      # (TB, M) f32 acc
    o_ref[...] = (a_ref[...] * z + mm + h1_ref[...]).astype(o_ref.dtype)


def _rollout_kernel(z0_ref, w2_ref, w1_ref, a_ref, h2_ref, h1_ref, o_ref, state):
    # Latent state is carried across the time grid in VMEM scratch.
    @pl.when(pl.program_id(0) == 0)
    def _():
        state[...] = z0_ref[...]

    z = state[...]                                        # (B, M) f32
    hid = _matmul_t(z, w2_ref[...])
    hid = jnp.maximum(hid + h2_ref[...], 0.0)
    mm = _matmul_t(hid, w1_ref[...])
    z_new = a_ref[...] * z + mm + h1_ref[...]
    state[...] = z_new
    o_ref[0] = z_new.astype(o_ref.dtype)


# ----------------------------- wrappers -------------------------------------

def prepare_params(W1, W2, A, h2, h1):
    """One-time conversion: weights -> bf16 for the MXU, 1-D params -> (1, dim) f32."""
    M, L = W1.shape
    return (W1.astype(jnp.bfloat16),                 # (M, L) native layout
            W2.astype(jnp.bfloat16),                 # (L, M) native layout
            A.reshape(1, M).astype(jnp.float32),
            h2.reshape(1, L).astype(jnp.float32),
            h1.reshape(1, M).astype(jnp.float32))


def _vmem_limit_bytes(*nbytes):
    need = sum(nbytes)
    # 2x headroom for double-buffered blocks + compiler scratch; stay well
    # under every generation's physical VMEM (v7x: 64 MiB per TensorCore).
    return int(min(max(2 * need + (4 << 20), 16 << 20), 48 << 20))


def custom_rnn_step(z, params):
    """One latent-state update on a (B, M) batch (matches CustomRNN.forward)."""
    W1b, W2b, A2, h2_2, h1_2 = params
    B, M = z.shape
    L = W1b.shape[1]

    # Largest lane-dense batch tile that divides B (fills MXU rows when B is
    # large; falls back to the full batch for small B).
    TB = next((t for t in (512, 256, 128) if B % t == 0), B)

    const2d = lambda shape: pl.BlockSpec(shape, lambda b: (0, 0))
    cost = pl.CostEstimate(
        flops=4 * B * M * L,
        transcendentals=0,
        bytes_accessed=2 * (2 * M * L) + 4 * (2 * B * M + 2 * M + L),
    )
    return pl.pallas_call(
        _step_kernel,
        out_shape=jax.ShapeDtypeStruct((B, M), z.dtype),
        grid_spec=pltpu.PrefetchScalarGridSpec(
            num_scalar_prefetch=0,
            grid=(B // TB,),
            in_specs=[
                pl.BlockSpec((TB, M), lambda b: (b, 0)),   # z
                const2d((L, M)),                           # W2 (bf16, fetched once)
                const2d((M, L)),                           # W1 (bf16, fetched once)
                const2d((1, M)),                           # A
                const2d((1, L)),                           # h2
                const2d((1, M)),                           # h1
            ],
            out_specs=pl.BlockSpec((TB, M), lambda b: (b, 0)),
        ),
        compiler_params=pltpu.CompilerParams(
            dimension_semantics=("parallel",),
            vmem_limit_bytes=_vmem_limit_bytes(
                2 * 2 * M * L, 4 * TB * (3 * M + L), 4 * (2 * M + L)),
        ),
        cost_estimate=cost,
    )(z, W2b, W1b, A2, h2_2, h1_2)


def custom_rnn_rollout(z0, params, num_steps):
    """Apply CustomRNN.forward `num_steps` times inside one kernel.

    Weights stay VMEM-resident for all steps; returns the (T, B, M) trajectory.
    """
    W1b, W2b, A2, h2_2, h1_2 = params
    B, M = z0.shape
    L = W1b.shape[1]
    T = int(num_steps)

    const = lambda shape: pl.BlockSpec(shape, lambda t: (0,) * len(shape))
    cost = pl.CostEstimate(
        flops=4 * B * M * L * T,
        transcendentals=0,
        bytes_accessed=2 * (2 * M * L) + 4 * (B * M + T * B * M + 2 * M + L),
    )
    return pl.pallas_call(
        _rollout_kernel,
        out_shape=jax.ShapeDtypeStruct((T, B, M), z0.dtype),
        grid_spec=pltpu.PrefetchScalarGridSpec(
            num_scalar_prefetch=0,
            grid=(T,),
            in_specs=[
                const((B, M)),       # z0 (read only at t == 0)
                const((L, M)),       # W2, DMA'd once, resident for all T steps
                const((M, L)),       # W1
                const((1, M)),       # A
                const((1, L)),       # h2
                const((1, M)),       # h1
            ],
            out_specs=pl.BlockSpec((1, B, M), lambda t: (t, 0, 0)),
            scratch_shapes=[pltpu.VMEM((B, M), jnp.float32)],   # carried state
        ),
        compiler_params=pltpu.CompilerParams(
            dimension_semantics=("arbitrary",),   # sequential recurrence
            vmem_limit_bytes=_vmem_limit_bytes(
                2 * 2 * M * L, 4 * B * (4 * M + L), 4 * (2 * M + L)),
        ),
        cost_estimate=cost,
    )(z0, W2b, W1b, A2, h2_2, h1_2)


def custom_rnn_forward(z, W1, W2, A, h2, h1):
    """Drop-in single-call forward matching CustomRNN.forward ((M,) or (B, M))."""
    squeeze = z.ndim == 1
    z2 = z[None, :] if squeeze else z
    out = custom_rnn_step(z2, prepare_params(W1, W2, A, h2, h1))
    return out[0] if squeeze else out


# ----------------------------- reference & init -----------------------------

def init_params(key, latent_dim, hidden_dim):
    """Deterministic init matching CustomRNN.init_parameters shapes/ranges."""
    M, L = latent_dim, hidden_dim
    r1 = 1.0 / L ** 0.5
    r2 = 1.0 / M ** 0.5
    k1, k2, k3, k4 = jax.random.split(key, 4)
    W1 = jax.random.uniform(k1, (M, L), jnp.float32, -r1, r1)
    W2 = jax.random.uniform(k2, (L, M), jnp.float32, -r2, r2)
    A = jax.random.uniform(k3, (M,), jnp.float32, 0.5, 0.9)
    h2 = jax.random.uniform(k4, (L,), jnp.float32, -r1, r1)
    h1 = jnp.zeros((M,), jnp.float32)
    return W1, W2, A, h2, h1


def reference_step(z, W1, W2, A, h2, h1):
    return A * z + jnp.maximum(z @ W2.T + h2, 0.0) @ W1.T + h1


def reference_rollout(z, W1, W2, A, h2, h1, num_steps):
    outs = []
    for _ in range(num_steps):
        z = reference_step(z, W1, W2, A, h2, h1)
        outs.append(z)
    return jnp.stack(outs)


if __name__ == "__main__":
    B, M, L = 8, 128, 128      # batch, latent_dim, hidden_dim
    T = 6                      # fused-rollout timesteps

    key = jax.random.PRNGKey(0)
    kp, kz = jax.random.split(key)
    W1, W2, A, h2, h1 = init_params(kp, M, L)
    z = jax.random.normal(kz, (B, M), jnp.float32)

    params = prepare_params(W1, W2, A, h2, h1)   # one-time bf16 conversion

    # Single step (matches CustomRNN.forward). bf16 MXU inputs -> looser tol.
    out = jax.block_until_ready(custom_rnn_step(z, params))
    ref = reference_step(z, W1, W2, A, h2, h1)
    assert out.shape == (B, M)
    assert jnp.allclose(out, ref, atol=3e-2, rtol=3e-2), \
        float(jnp.max(jnp.abs(out - ref)))

    # Fused T-step rollout (forward applied T times inside one pallas_call).
    traj = jax.block_until_ready(custom_rnn_rollout(z, params, T))
    ref_traj = reference_rollout(z, W1, W2, A, h2, h1, T)
    assert traj.shape == (T, B, M)
    assert jnp.allclose(traj, ref_traj, atol=1e-1, rtol=1e-1), \
        float(jnp.max(jnp.abs(traj - ref_traj)))

    print("KERNEL_OK")
</pallas_src>

<mosaic_0001>
module attributes {stable_mosaic.version = 11 : i64} {
  func.func @_step_kernel(%arg0: i32, %arg1: memref<8x128xf32, #tpu.memory_space<vmem>>, %arg2: memref<128x128xbf16, #tpu.memory_space<vmem>>, %arg3: memref<128x128xbf16, #tpu.memory_space<vmem>>, %arg4: memref<1x128xf32, #tpu.memory_space<vmem>>, %arg5: memref<1x128xf32, #tpu.memory_space<vmem>>, %arg6: memref<1x128xf32, #tpu.memory_space<vmem>>, %arg7: memref<8x128xf32, #tpu.memory_space<vmem>>) attributes {dimension_semantics = [#tpu.dimension_semantics<parallel>], iteration_bounds = array<i64: 1>, scalar_prefetch = 0 : i64, scratch_operands = 0 : i64, tpu.core_type = #tpu.core_type<tc>, window_params = [{transform_indices = @transform_0, window_bounds = array<i64: 8, 128>}, {pipeline_mode = #tpu.pipeline_mode<synchronous>, transform_indices = @transform_1, window_bounds = array<i64: 128, 128>}, {pipeline_mode = #tpu.pipeline_mode<synchronous>, transform_indices = @transform_2, window_bounds = array<i64: 128, 128>}, {pipeline_mode = #tpu.pipeline_mode<synchronous>, transform_indices = @transform_3, window_bounds = array<i64: 1, 128>}, {pipeline_mode = #tpu.pipeline_mode<synchronous>, transform_indices = @transform_4, window_bounds = array<i64: 1, 128>}, {pipeline_mode = #tpu.pipeline_mode<synchronous>, transform_indices = @transform_5, window_bounds = array<i64: 1, 128>}, {transform_indices = @transform_6, window_bounds = array<i64: 8, 128>}]} {
    %c0 = arith.constant 0 : index
    %c0_0 = arith.constant 0 : index
    %0 = vector.load %arg1[%c0, %c0_0] : memref<8x128xf32, #tpu.memory_space<vmem>>, vector<8x128xf32>
    %c0_1 = arith.constant 0 : index
    %c0_2 = arith.constant 0 : index
    %1 = vector.load %arg2[%c0_1, %c0_2] : memref<128x128xbf16, #tpu.memory_space<vmem>>, vector<128x128xbf16>
    %2 = arith.truncf %0 : vector<8x128xf32> to vector<8x128xbf16>
    %cst = arith.constant dense<0.000000e+00> : vector<8x128xf32>
    %3 = tpu.matmul %2, %1, %cst {dimension_numbers = #tpu.dot_dimension_numbers<[1], [1], [0], [0], [0, 0, 1, 0], [], []>} : vector<8x128xbf16>, vector<128x128xbf16>, vector<8x128xf32> -> vector<8x128xf32>
    %c0_3 = arith.constant 0 : index
    %c0_4 = arith.constant 0 : index
    %4 = vector.load %arg5[%c0_3, %c0_4] : memref<1x128xf32, #tpu.memory_space<vmem>>, vector<1x128xf32>
    %5 = vector.broadcast %4 : vector<1x128xf32> to vector<8x128xf32>
    %6 = arith.addf %3, %5 : vector<8x128xf32>
    %cst_5 = arith.constant 0.000000e+00 : f32
    %7 = vector.broadcast %cst_5 : f32 to vector<8x128xf32>
    %8 = arith.maximumf %6, %7 : vector<8x128xf32>
    %c0_6 = arith.constant 0 : index
    %c0_7 = arith.constant 0 : index
    %9 = vector.load %arg3[%c0_6, %c0_7] : memref<128x128xbf16, #tpu.memory_space<vmem>>, vector<128x128xbf16>
    %10 = arith.truncf %8 : vector<8x128xf32> to vector<8x128xbf16>
    %cst_8 = arith.constant dense<0.000000e+00> : vector<8x128xf32>
    %11 = tpu.matmul %10, %9, %cst_8 {dimension_numbers = #tpu.dot_dimension_numbers<[1], [1], [0], [0], [0, 0, 1, 0], [], []>} : vector<8x128xbf16>, vector<128x128xbf16>, vector<8x128xf32> -> vector<8x128xf32>
    %c0_9 = arith.constant 0 : index
    %c0_10 = arith.constant 0 : index
    %12 = vector.load %arg4[%c0_9, %c0_10] : memref<1x128xf32, #tpu.memory_space<vmem>>, vector<1x128xf32>
    %13 = vector.broadcast %12 : vector<1x128xf32> to vector<8x128xf32>
    %14 = arith.mulf %13, %0 : vector<8x128xf32>
    %15 = arith.addf %14, %11 : vector<8x128xf32>
    %c0_11 = arith.constant 0 : index
    %c0_12 = arith.constant 0 : index
    %16 = vector.load %arg6[%c0_11, %c0_12] : memref<1x128xf32, #tpu.memory_space<vmem>>, vector<1x128xf32>
    %17 = vector.broadcast %16 : vector<1x128xf32> to vector<8x128xf32>
    %18 = arith.addf %15, %17 : vector<8x128xf32>
    %c0_13 = arith.constant 0 : index
    %c0_14 = arith.constant 0 : index
    %19 = vector.load %arg7[%c0_13, %c0_14] : memref<8x128xf32, #tpu.memory_space<vmem>>, vector<8x128xf32>
    tpu.vector_store %arg7[%c0_13, %c0_14], %18 {strides = array<i32>} : memref<8x128xf32, #tpu.memory_space<vmem>>, vector<8x128xf32>,
    return
  }
  func.func @transform_0(%arg0: i32) -> (i32, i32) {
    %c0_i32 = arith.constant 0 : i32
    %c0_i32_0 = arith.constant 0 : i32
    return %arg0, %c0_i32 : i32, i32
  }
  func.func @transform_1(%arg0: i32) -> (i32, i32) {
    %c0_i32 = arith.constant 0 : i32
    %c0_i32_0 = arith.constant 0 : i32
    %c0_i32_1 = arith.constant 0 : i32
    return %c0_i32, %c0_i32_0 : i32, i32
  }
  func.func @transform_2(%arg0: i32) -> (i32, i32) {
    %c0_i32 = arith.constant 0 : i32
    %c0_i32_0 = arith.constant 0 : i32
    %c0_i32_1 = arith.constant 0 : i32
    return %c0_i32, %c0_i32_0 : i32, i32
  }
  func.func @transform_3(%arg0: i32) -> (i32, i32) {
    %c0_i32 = arith.constant 0 : i32
    %c0_i32_0 = arith.constant 0 : i32
    %c0_i32_1 = arith.constant 0 : i32
    return %c0_i32, %c0_i32_0 : i32, i32
  }
  func.func @transform_4(%arg0: i32) -> (i32, i32) {
    %c0_i32 = arith.constant 0 : i32
    %c0_i32_0 = arith.constant 0 : i32
    %c0_i32_1 = arith.constant 0 : i32
    return %c0_i32, %c0_i32_0 : i32, i32
  }
  func.func @transform_5(%arg0: i32) -> (i32, i32) {
    %c0_i32 = arith.constant 0 : i32
    %c0_i32_0 = arith.constant 0 : i32
    %c0_i32_1 = arith.constant 0 : i32
    return %c0_i32, %c0_i32_0 : i32, i32
  }
  func.func @transform_6(%arg0: i32) -> (i32, i32) {
    %c0_i32 = arith.constant 0 : i32
    %c0_i32_0 = arith.constant 0 : i32
    return %arg0, %c0_i32 : i32, i32
  }
}

</mosaic_0001>

<llo_original>
// kernel: tpu_custom_call.1
$region0: #{tpu_custom_call.1}
  #allocation0 [shape = 'u32[]', space=smem, size = 0x4, offset = 0x4, fixed_abs, tag = 'smem constant byte address 0x4 - core index']
  #allocation1 [shape = 'u32[144,128]{1,0:T(1,128)}', space=vmem, size = 0x12000, scoped, tag = 'internal scratch']
  %s0 = inlined_call_operand.hbm [shape: f32[8,128], index: 0, kind: input, shape index: {}]
  %s1 = inlined_call_operand.hbm [shape: bf16[128,128], index: 1, kind: input, shape index: {}]
  %s2 = inlined_call_operand.hbm [shape: bf16[128,128], index: 2, kind: input, shape index: {}]
  %s3 = inlined_call_operand.vmem [shape: f32[1,128], index: 3, kind: input, shape index: {}]
  %s4 = inlined_call_operand.vmem [shape: f32[1,128], index: 4, kind: input, shape index: {}]
  %s5 = inlined_call_operand.vmem [shape: f32[1,128], index: 5, kind: input, shape index: {}]
  %s6 = inlined_call_operand.hbm [shape: f32[8,128], index: 6, kind: output, shape index: {}]
  %s7 = sld [smem:[#allocation0]]
  $region46: #{tpu_custom_call.1} parent=0
    _
  %s9 = ssub.s32 1, %s7
  %s10 = scalar_select 0, %s9, %s7
  $region1: #{tpu_custom_call.1} parent=0
    #allocation2 [shape = 'u8[4096]{0}', space=vmem, size = 0x1000, scoped, tag = 'input window, operand 0, single buffered']
    #allocation3 [shape = 's32[1]{0}', space=sflag, size = 0x4, scoped, tag = 'scoped memory for tpu_custom_call.1']
    #allocation4 [shape = 's32[1]{0}', space=sflag, size = 0x4, scoped, tag = 'scoped memory for tpu_custom_call.1']
    #allocation5 [shape = 'u8[32768]{0}', space=vmem, size = 0x8000, scoped, tag = 'input window, operand 1, single buffered']
    #allocation6 [shape = 's32[1]{0}', space=sflag, size = 0x4, scoped, tag = 'scoped memory for tpu_custom_call.1']
    #allocation7 [shape = 'u8[32768]{0}', space=vmem, size = 0x8000, scoped, tag = 'input window, operand 2, single buffered']
    #allocation8 [shape = 'u8[4096]{0}', space=vmem, size = 0x1000, scoped, tag = 'output window, operand 0, single buffered']
    %11 = vsyncpa [#allocation3], 0
    %12 = vsyncpa [#allocation6], 0
    %13 = vsyncpa [#allocation4], 0
    // Predicated region
    $region2: #{tpu_custom_call.1} parent=1 // pred_check
      _
    $region3: #{tpu_custom_call.1} parent=1 // pred_check_branch
      %15 = sbr.rel (0) target = $region5
    $region4: #{tpu_custom_call.1} parent=1 // pred_region
      %s17 = ssub.s32 128, 128
      %18 = vsyncadd [#allocation3], %s17
      %s20 = sshll.u32 [#allocation2], 4
      %s21 = int_to_ptr.vmem [resolvable:$true] %s20
      %23 = dma.hbm_to_vmem [thread:$0]  %s0, 128, %s21, [#allocation3]
    $region5: #{tpu_custom_call.1} parent=1 // pred_fallthru
      _
    // Predicated region
    $region6: #{tpu_custom_call.1} parent=1 // pred_check
      _
    $region7: #{tpu_custom_call.1} parent=1 // pred_check_branch
      %25 = sbr.rel (0) target = $region9
    $region8: #{tpu_custom_call.1} parent=1 // pred_region
      %s27 = ssub.s32 1024, 1024
      %28 = vsyncadd [#allocation6], %s27
      %s29 = sshll.u32 [#allocation5], 4
      %s30 = int_to_ptr.vmem [resolvable:$true] %s29
      %35 = dma.hbm_to_vmem [thread:$0]  %s1, 1024, %s30, [#allocation6], 64, 64, 4
    $region9: #{tpu_custom_call.1} parent=1 // pred_fallthru
      _
    // Predicated region
    $region10: #{tpu_custom_call.1} parent=1 // pred_check
      _
    $region11: #{tpu_custom_call.1} parent=1 // pred_check_branch
      %37 = sbr.rel (0) target = $region13
    $region12: #{tpu_custom_call.1} parent=1 // pred_region
      %s39 = ssub.s32 1024, 1024
      %40 = vsyncadd [#allocation6], %s39
      %s41 = sshll.u32 [#allocation7], 4
      %s42 = int_to_ptr.vmem [resolvable:$true] %s41
      %47 = dma.hbm_to_vmem [thread:$0]  %s2, 1024, %s42, [#allocation6], 64, 64, 4
    $region13: #{tpu_custom_call.1} parent=1 // pred_fallthru
      _
    // Predicated region
    $region14: #{tpu_custom_call.1} parent=1 // pred_check
      _
    $region15: #{tpu_custom_call.1} parent=1 // pred_check_branch
      %49 = sbr.rel (0) target = $region17
    $region16: #{tpu_custom_call.1} parent=1 // pred_region
      _
    $region17: #{tpu_custom_call.1} parent=1 // pred_fallthru
      _
    // Predicated region
    $region18: #{tpu_custom_call.1} parent=1 // pred_check
      _
    $region19: #{tpu_custom_call.1} parent=1 // pred_check_branch
      %51 = sbr.rel (0) target = $region21
    $region20: #{tpu_custom_call.1} parent=1 // pred_region
      _
    $region21: #{tpu_custom_call.1} parent=1 // pred_fallthru
      _
    // Predicated region
    $region22: #{tpu_custom_call.1} parent=1 // pred_check
      _
    $region23: #{tpu_custom_call.1} parent=1 // pred_check_branch
      %53 = sbr.rel (0) target = $region25
    $region24: #{tpu_custom_call.1} parent=1 // pred_region
      _
    $region25: #{tpu_custom_call.1} parent=1 // pred_fallthru
      _
    // Predicated region
    $region26: #{tpu_custom_call.1} parent=1 // pred_check
      _
    $region27: #{tpu_custom_call.1} parent=1 // pred_check_branch
      %55 = sbr.rel (0) target = $region29
    $region28: #{tpu_custom_call.1} parent=1 // pred_region
      %56 = dma.done [#allocation3], 128
    $region29: #{tpu_custom_call.1} parent=1 // pred_fallthru
      _
    // Predicated region
    $region30: #{tpu_custom_call.1} parent=1 // pred_check
      _
    $region31: #{tpu_custom_call.1} parent=1 // pred_check_branch
      %58 = sbr.rel (0) target = $region33
    $region32: #{tpu_custom_call.1} parent=1 // pred_region
      %59 = dma.done [#allocation6], 1024
    $region33: #{tpu_custom_call.1} parent=1 // pred_fallthru
      _
    // Predicated region
    $region34: #{tpu_custom_call.1} parent=1 // pred_check
      _
    $region35: #{tpu_custom_call.1} parent=1 // pred_check_branch
      %61 = sbr.rel (0) target = $region37
    $region36: #{tpu_custom_call.1} parent=1 // pred_region
      %62 = dma.done [#allocation6], 1024
    $region37: #{tpu_custom_call.1} parent=1 // pred_fallthru
      _
    %v64 = vld [vmem:[#allocation2] sm:$0xff]
    %v65 = vld [vmem:[#allocation5] sm:$0xf]
    %v66 = vld [vmem:[#allocation5 + $0x4] sm:$0xf]
    %v67 = vld [vmem:[#allocation5 + $0x8] sm:$0xf]
    %v68 = vld [vmem:[#allocation5 + $0xc] sm:$0xf]
    %v69 = vld [vmem:[#allocation5 + $0x10] sm:$0xf]
    %v70 = vld [vmem:[#allocation5 + $0x14] sm:$0xf]
    %v71 = vld [vmem:[#allocation5 + $0x18] sm:$0xf]
    %v72 = vld [vmem:[#allocation5 + $0x1c] sm:$0xf]
    %v73 = vld [vmem:[#allocation5 + $0x20] sm:$0xf]
    %v74 = vld [vmem:[#allocation5 + $0x24] sm:$0xf]
    %v75 = vld [vmem:[#allocation5 + $0x28] sm:$0xf]
    %v76 = vld [vmem:[#allocation5 + $0x2c] sm:$0xf]
    %v77 = vld [vmem:[#allocation5 + $0x30] sm:$0xf]
    %v78 = vld [vmem:[#allocation5 + $0x34] sm:$0xf]
    %v79 = vld [vmem:[#allocation5 + $0x38] sm:$0xf]
    %v80 = vld [vmem:[#allocation5 + $0x3c] sm:$0xf]
    %v81 = vpack.c.bf16 %v64, %v64
    %v82 = vld [vmem:[%s4] sm:$0x1]
    %v84 = vlaneseq
    %v85 = vshrl.u32 %v84, 7
    %v86 = vsub.s32 0, %v85
    %v87 = vrot.slane %v82, %v86
    %v105 = vunpack.c.l.b16 %v65
    %v106 = vunpack.c.l.b16 %v66
    %v107 = vunpack.c.l.b16 %v67
    %v108 = vunpack.c.l.b16 %v68
    %v109 = vunpack.c.l.b16 %v69
    %v110 = vunpack.c.l.b16 %v70
    %v111 = vunpack.c.l.b16 %v71
    %v112 = vunpack.c.l.b16 %v72
    %v113 = vunpack.c.l.b16 %v73
    %v114 = vunpack.c.l.b16 %v74
    %v115 = vunpack.c.l.b16 %v75
    %v116 = vunpack.c.l.b16 %v76
    %v117 = vunpack.c.l.b16 %v77
    %v118 = vunpack.c.l.b16 %v78
    %v119 = vunpack.c.l.b16 %v79
    %v120 = vunpack.c.l.b16 %v80
    %v121 = vpack.c.b16 %v106, %v105
    %v122 = vpack.c.b16 %v108, %v107
    %v123 = vpack.c.b16 %v110, %v109
    %v124 = vpack.c.b16 %v112, %v111
    %v125 = vpack.c.b16 %v114, %v113
    %v126 = vpack.c.b16 %v116, %v115
    %v127 = vpack.c.b16 %v118, %v117
    %v128 = vpack.c.b16 %v120, %v119
    %137 = vmatprep.subr.bf16.mxu0 0
    %138 = vmatpush1.bf16.xpose.msra.mxu0 %v121
    %139 = vmatprep.subr.bf16.mxu0 0
    %140 = vmatpush1.bf16.xpose.msra.mxu0 %v122
    %141 = vmatprep.subr.bf16.mxu0 0
    %142 = vmatpush1.bf16.xpose.msra.mxu0 %v123
    %143 = vmatprep.subr.bf16.mxu0 0
    %144 = vmatpush1.bf16.xpose.msra.mxu0 %v124
    %145 = vmatprep.subr.bf16.mxu0 0
    %146 = vmatpush1.bf16.xpose.msra.mxu0 %v125
    %147 = vmatprep.subr.bf16.mxu0 0
    %148 = vmatpush1.bf16.xpose.msra.mxu0 %v126
    %149 = vmatprep.subr.bf16.mxu0 0
    %150 = vmatpush1.bf16.xpose.msra.mxu0 %v127
    %151 = vmatprep.subr.bf16.mxu0 0
    %152 = vmatpush1.bf16.xpose.msra.mxu0 %v128
    %153 = vmatprep.subr.bf16.mxu0 0
    %154 = vmatpush1.bf16.xpose.msra.mxu0 0
    %155 = vmatprep.subr.bf16.mxu0 0
    %156 = vmatpush1.bf16.xpose.msra.mxu0 0
    %157 = vmatprep.subr.bf16.mxu0 0
    %158 = vmatpush1.bf16.xpose.msra.mxu0 0
    %159 = vmatprep.subr.bf16.mxu0 0
    %160 = vmatpush1.bf16.xpose.msra.mxu0 0
    %161 = vmatprep.subr.bf16.mxu0 0
    %162 = vmatpush1.bf16.xpose.msra.mxu0 0
    %163 = vmatprep.subr.bf16.mxu0 0
    %164 = vmatpush1.bf16.xpose.msra.mxu0 0
    %165 = vmatprep.subr.bf16.mxu0 0
    %166 = vmatpush1.bf16.xpose.msra.mxu0 0
    %167 = vmatprep.subr.bf16.mxu0 0
    %168 = vmatpush1.bf16.xpose.msra.mxu0 0
    %169 = vmatprep.mubr.bf16.mxu0 0
    %170 = vmatmul.mubr.bf16.gmra.mrb[0].mxu0 %v81
    %v171 = vpop.f32.mrb[0].mxu0
    %v172 = vadd.f32 %v87, %v171
    %v173 = vpop.f32.mrb[0].mxu0
    %v174 = vpop.f32.mrb[0].mxu0
    %v175 = vpop.f32.mrb[0].mxu0
    %176 = vdwg.mxu0
    %v177 = vmax.f32 %v172, 0.0
    %v178 = vld [vmem:[#allocation7] sm:$0xf]
    %v179 = vld [vmem:[#allocation7 + $0x4] sm:$0xf]
    %v180 = vld [vmem:[#allocation7 + $0x8] sm:$0xf]
    %v181 = vld [vmem:[#allocation7 + $0xc] sm:$0xf]
    %v182 = vld [vmem:[#allocation7 + $0x10] sm:$0xf]
    %v183 = vld [vmem:[#allocation7 + $0x14] sm:$0xf]
    %v184 = vld [vmem:[#allocation7 + $0x18] sm:$0xf]
    %v185 = vld [vmem:[#allocation7 + $0x1c] sm:$0xf]
    %v186 = vld [vmem:[#allocation7 + $0x20] sm:$0xf]
    %v187 = vld [vmem:[#allocation7 + $0x24] sm:$0xf]
    %v188 = vld [vmem:[#allocation7 + $0x28] sm:$0xf]
    %v189 = vld [vmem:[#allocation7 + $0x2c] sm:$0xf]
    %v190 = vld [vmem:[#allocation7 + $0x30] sm:$0xf]
    %v191 = vld [vmem:[#allocation7 + $0x34] sm:$0xf]
    %v192 = vld [vmem:[#allocation7 + $0x38] sm:$0xf]
    %v193 = vld [vmem:[#allocation7 + $0x3c] sm:$0xf]
    %v194 = vpack.c.bf16 %v177, %v177
    %v211 = vunpack.c.l.b16 %v178
    %v212 = vunpack.c.l.b16 %v179
    %v213 = vunpack.c.l.b16 %v180
    %v214 = vunpack.c.l.b16 %v181
    %v215 = vunpack.c.l.b16 %v182
    %v216 = vunpack.c.l.b16 %v183
    %v217 = vunpack.c.l.b16 %v184
    %v218 = vunpack.c.l.b16 %v185
    %v219 = vunpack.c.l.b16 %v186
    %v220 = vunpack.c.l.b16 %v187
    %v221 = vunpack.c.l.b16 %v188
    %v222 = vunpack.c.l.b16 %v189
    %v223 = vunpack.c.l.b16 %v190
    %v224 = vunpack.c.l.b16 %v191
    %v225 = vunpack.c.l.b16 %v192
    %v226 = vunpack.c.l.b16 %v193
    %v227 = vpack.c.b16 %v212, %v211
    %v228 = vpack.c.b16 %v214, %v213
    %v229 = vpack.c.b16 %v216, %v215
    %v230 = vpack.c.b16 %v218, %v217
    %v231 = vpack.c.b16 %v220, %v219
    %v232 = vpack.c.b16 %v222, %v221
    %v233 = vpack.c.b16 %v224, %v223
    %v234 = vpack.c.b16 %v226, %v225
    %243 = vmatprep.subr.bf16.mxu0 0
    %244 = vmatpush1.bf16.xpose.msra.mxu0 %v227
    %245 = vmatprep.subr.bf16.mxu0 0
    %246 = vmatpush1.bf16.xpose.msra.mxu0 %v228
    %247 = vmatprep.subr.bf16.mxu0 0
    %248 = vmatpush1.bf16.xpose.msra.mxu0 %v229
    %249 = vmatprep.subr.bf16.mxu0 0
    %250 = vmatpush1.bf16.xpose.msra.mxu0 %v230
    %251 = vmatprep.subr.bf16.mxu0 0
    %252 = vmatpush1.bf16.xpose.msra.mxu0 %v231
    %253 = vmatprep.subr.bf16.mxu0 0
    %254 = vmatpush1.bf16.xpose.msra.mxu0 %v232
    %255 = vmatprep.subr.bf16.mxu0 0
    %256 = vmatpush1.bf16.xpose.msra.mxu0 %v233
    %257 = vmatprep.subr.bf16.mxu0 0
    %258 = vmatpush1.bf16.xpose.msra.mxu0 %v234
    %259 = vmatprep.subr.bf16.mxu0 0
    %260 = vmatpush1.bf16.xpose.msra.mxu0 0
    %261 = vmatprep.subr.bf16.mxu0 0
    %262 = vmatpush1.bf16.xpose.msra.mxu0 0
    %263 = vmatprep.subr.bf16.mxu0 0
    %264 = vmatpush1.bf16.xpose.msra.mxu0 0
    %265 = vmatprep.subr.bf16.mxu0 0
    %266 = vmatpush1.bf16.xpose.msra.mxu0 0
    %267 = vmatprep.subr.bf16.mxu0 0
    %268 = vmatpush1.bf16.xpose.msra.mxu0 0
    %269 = vmatprep.subr.bf16.mxu0 0
    %270 = vmatpush1.bf16.xpose.msra.mxu0 0
    %271 = vmatprep.subr.bf16.mxu0 0
    %272 = vmatpush1.bf16.xpose.msra.mxu0 0
    %273 = vmatprep.subr.bf16.mxu0 0
    %274 = vmatpush1.bf16.xpose.msra.mxu0 0
    %275 = vmatprep.mubr.bf16.mxu0 0
    %276 = vmatmul.mubr.bf16.gmra.mrb[0].mxu0 %v194
    %v277 = vpop.f32.mrb[0].mxu0
    %v278 = vadd.f32 0.0, %v277
    %v279 = vpop.f32.mrb[0].mxu0
    %v280 = vpop.f32.mrb[0].mxu0
    %v281 = vpop.f32.mrb[0].mxu0
    %282 = vdwg.mxu0
    %v283 = vld [vmem:[%s3] sm:$0x1]
    %v285 = vlaneseq
    %v286 = vshrl.u32 %v285, 7
    %v287 = vsub.s32 0, %v286
    %v288 = vrot.slane %v283, %v287
    %v290 = vmul.f32 %v288, %v64
    %v291 = vadd.f32 %v290, %v278
    %v292 = vld [vmem:[%s5] sm:$0x1]
    %v294 = vlaneseq
    %v295 = vshrl.u32 %v294, 7
    %v296 = vsub.s32 0, %v295
    %v297 = vrot.slane %v292, %v296
    %v299 = vadd.f32 %v291, %v297
    %300 = vst [vmem:[#allocation8] sm:$0xff] %v299
    // Predicated region
    $region38: #{tpu_custom_call.1} parent=1 // pred_check
      _
    $region39: #{tpu_custom_call.1} parent=1 // pred_check_branch
      %302 = sbr.rel (0) target = $region41
    $region40: #{tpu_custom_call.1} parent=1 // pred_region
      %s304 = ssub.s32 128, 128
      %305 = vsyncadd [#allocation4], %s304
      %s307 = sshll.u32 [#allocation8], 4
      %s308 = int_to_ptr.vmem [resolvable:$true] %s307
      %310 = dma.vmem_to_hbm [thread:$0]  %s308, 128, %s6, [#allocation4]
    $region41: #{tpu_custom_call.1} parent=1 // pred_fallthru
      _
    // Predicated region
    $region42: #{tpu_custom_call.1} parent=1 // pred_check
      _
    $region43: #{tpu_custom_call.1} parent=1 // pred_check_branch
      %312 = sbr.rel (0) target = $region45
    $region44: #{tpu_custom_call.1} parent=1 // pred_region
      %313 = dma.done [#allocation4], 128
    $region45: #{tpu_custom_call.1} parent=1 // pred_fallthru
      _
    %314 = vsyncpa [#allocation3], 1
    %315 = vsyncpa [#allocation6], 1
    %316 = vsyncpa [#allocation4], 1

</llo_original>
